<compile_context>
chip_gen: v7x
topology: tpu7x:2x2x1
jax: 0.10.0
libtpu: 0.0.40
codegen_flags: <defaults>
</compile_context>

<pallas_src>
import jax
import jax.numpy as jnp
from jax.experimental import pallas as pl
from jax.experimental.pallas import tpu as pltpu

_HP = 128  # hidden dim (50) zero-padded to a full lane width


def _round_up(n, m):
    return (n + m - 1) // m * m


def _mlp_tile(x_ref, w1_ref, b1_ref, w2_ref):
    # fc1 on the MXU: in-kernel bf16 cast (VPU, hidden under DMA), f32 accum.
    xb = x_ref[...].astype(jnp.bfloat16)
    h = jnp.dot(xb, w1_ref[...], preferred_element_type=jnp.float32)   # (TB,128)
    h = jnp.maximum(h + b1_ref[...], 0.0)                              # bias+ReLU
    # fc2: a (TB,128)@(128,1) MXU matmul would use 1 of 256 MXU columns; do a
    # VPU multiply + lane reduction instead.  Padded hidden cols are exactly 0.
    return jnp.sum(h * w2_ref[...], axis=-1, keepdims=True)            # (TB,1)


def _mlp_kernel_row(x_ref, w1_ref, b1_ref, w2_ref, b2_ref, o_ref):
    y = _mlp_tile(x_ref, w1_ref, b1_ref, w2_ref)       # (TB, 1)
    y = jnp.transpose(y) + b2_ref[0, 0]                # (1, TB) lane-dense (XLU)
    o_ref[...] = 1.0 / (1.0 + jnp.exp(-y))             # exact sigmoid (EUP)


def _mlp_kernel_col(x_ref, w1_ref, b1_ref, w2_ref, b2_ref, o_ref):
    y = _mlp_tile(x_ref, w1_ref, b1_ref, w2_ref) + b2_ref[0, 0]        # (TB, 1)
    o_ref[...] = 1.0 / (1.0 + jnp.exp(-y))


def _vmem_limit_bytes():
    cap = 64 * 1024 * 1024                       # conservative (v7x) assumption
    try:
        cap = int(pltpu.get_tpu_info().vmem_capacity_bytes)
    except Exception:
        pass
    # 3/4 of physical: 48 MiB on v7x (64 MiB), 96 MiB on v5e/v6e (128 MiB).
    return int(min(96 * 1024 * 1024, (cap * 3) // 4))


def _choose_block_b(B, D, itemsize):
    # ~2 MiB of x per tile keeps the DMA pipeline near the HBM roofline
    # (per-grid-step overhead ~0.35us) while staying well inside VMEM.
    target_bytes = 2 * 1024 * 1024
    tile = _round_up(max(target_bytes // (D * itemsize), 8), 128)
    return min(tile, _round_up(B, 8))            # never pad more than one tile


def custom_model_forward(x, w1, b1, w2, b2, *, block_b=None):
    """sigmoid(relu(x @ w1 + b1) @ w2 + b2)

    x: (B, D) f32; w1: (D, 50); b1: (1, 50); w2: (50, 1); b2: (1, 1).
    Returns (B, 1) f32.  x / w1 are rounded to bf16 for the fc1 MXU matmul
    (deliberate accuracy/perf tradeoff); all accumulation and fc2 stay f32.
    """
    B, D = x.shape
    H = w1.shape[1]
    itemsize = jnp.dtype(x.dtype).itemsize

    # Hidden 50 -> 128 zero-pad: one tiny pass over the weights only (x is
    # untouched).  w1's bf16 cast is fused into this unavoidable pad copy.
    w1p = jnp.zeros((D, _HP), jnp.bfloat16).at[:, :H].set(w1.astype(jnp.bfloat16))
    b1p = jnp.zeros((1, _HP), jnp.float32).at[:, :H].set(
        jnp.asarray(b1, jnp.float32).reshape(1, H))
    w2p = jnp.zeros((1, _HP), jnp.float32).at[:, :H].set(
        jnp.asarray(w2, jnp.float32).reshape(1, H))
    b2s = jnp.asarray(b2, jnp.float32).reshape(1, 1)

    if block_b is None:
        block_b = _choose_block_b(B, D, itemsize)
    else:
        block_b = max(8, _round_up(block_b, 8))
        if block_b < B:                    # >1 grid step: keep output lanes aligned
            block_b = _round_up(block_b, 128)
        block_b = min(block_b, _round_up(B, 8))

    grid = pl.cdiv(B, block_b)
    bp = grid * block_b                    # only the OUTPUT is padded (4 B/row)

    in_specs = [
        pl.BlockSpec((block_b, D), lambda i: (i, 0)),        # x tile (pipelined)
        pl.BlockSpec((D, _HP), lambda i: (0, 0)),             # w1 (resident)
        pl.BlockSpec((1, _HP), lambda i: (0, 0)),             # b1 (resident)
        pl.BlockSpec((1, _HP), lambda i: (0, 0)),             # w2 row (resident)
        pl.BlockSpec(memory_space=pltpu.MemorySpace.SMEM),    # b2 scalar
    ]
    compiler_params = pltpu.CompilerParams(
        # TODO(synk): on v7x verify "parallel" really shards the batch axis
        # across both TensorCores; if not, switch to CORE_PARALLEL / core_map.
        dimension_semantics=("parallel",),
        vmem_limit_bytes=_vmem_limit_bytes(),
    )

    def run(lane_dense):
        if lane_dense:
            kernel = _mlp_kernel_row
            out_shape = jax.ShapeDtypeStruct((1, bp), jnp.float32)
            out_spec = pl.BlockSpec((1, block_b), lambda i: (0, i))
        else:
            kernel = _mlp_kernel_col
            out_shape = jax.ShapeDtypeStruct((bp, 1), jnp.float32)
            out_spec = pl.BlockSpec((block_b, 1), lambda i: (i, 0))
        return pl.pallas_call(
            kernel,
            out_shape=out_shape,
            grid=(grid,),
            in_specs=in_specs,
            out_specs=out_spec,
            compiler_params=compiler_params,
        )(x, w1p, b1p, w2p, b2s)

    try:
        out = run(lane_dense=True)         # (1, bp): full-width lane-dense stores
        return out.reshape(bp, 1)[:B]
    except Exception:
        # TODO(synk): fallback if the (TB,1)->(1,TB) in-kernel transpose fails
        # to lower on this toolchain; column stores are slower but correct.
        out = run(lane_dense=False)        # (bp, 1)
        return out[:B]


def init_params(key, input_dim, hidden=50, out=1):
    # Deterministic synthetic init (roughly matching nn.Linear's uniform init).
    k1, k2, k3, k4 = jax.random.split(key, 4)
    lim1 = 1.0 / jnp.sqrt(input_dim)
    lim2 = 1.0 / jnp.sqrt(hidden)
    w1 = jax.random.uniform(k1, (input_dim, hidden), jnp.float32, -lim1, lim1)
    b1 = jax.random.uniform(k2, (1, hidden), jnp.float32, -lim1, lim1)
    w2 = jax.random.uniform(k3, (hidden, out), jnp.float32, -lim2, lim2)
    b2 = jax.random.uniform(k4, (1, out), jnp.float32, -lim2, lim2)
    return w1, b1, w2, b2


if __name__ == "__main__":
    key = jax.random.PRNGKey(0)
    kx, kp = jax.random.split(key)

    batch, input_dim = 8, 32
    x = jax.random.normal(kx, (batch, input_dim), jnp.float32)
    w1, b1, w2, b2 = init_params(kp, input_dim)

    out = custom_model_forward(x, w1, b1, w2, b2)
    out = jax.block_until_ready(out)

    # Pure-JAX reference (mirrors the kernel's deliberate in-kernel bf16
    # rounding of x and w1; accumulation and fc2 stay f32).
    xr = x.astype(jnp.bfloat16).astype(jnp.float32)
    w1r = w1.astype(jnp.bfloat16).astype(jnp.float32)
    ref = jax.nn.sigmoid(jnp.maximum(xr @ w1r + b1, 0.0) @ w2 + b2)

    assert out.shape == (batch, 1)
    assert bool(jnp.all(jnp.isfinite(out)))
    assert jnp.allclose(out, ref, atol=2e-3, rtol=2e-3)

    print("KERNEL_OK")
</pallas_src>

<mosaic_0001>
module attributes {stable_mosaic.version = 11 : i64} {
  func.func @_mlp_kernel_row(%arg0: i32, %arg1: memref<8x32xf32, #tpu.memory_space<vmem>>, %arg2: memref<32x128xbf16, #tpu.memory_space<vmem>>, %arg3: memref<1x128xf32, #tpu.memory_space<vmem>>, %arg4: memref<1x128xf32, #tpu.memory_space<vmem>>, %arg5: memref<1x1xf32, #tpu.memory_space<smem>>, %arg6: memref<1x8xf32, #tpu.memory_space<vmem>>) attributes {dimension_semantics = [#tpu.dimension_semantics<parallel>], iteration_bounds = array<i64: 1>, scalar_prefetch = 0 : i64, scratch_operands = 0 : i64, tpu.core_type = #tpu.core_type<tc>, window_params = [{transform_indices = @transform_0, window_bounds = array<i64: 8, 32>}, {pipeline_mode = #tpu.pipeline_mode<synchronous>, transform_indices = @transform_1, window_bounds = array<i64: 32, 128>}, {pipeline_mode = #tpu.pipeline_mode<synchronous>, transform_indices = @transform_2, window_bounds = array<i64: 1, 128>}, {pipeline_mode = #tpu.pipeline_mode<synchronous>, transform_indices = @transform_3, window_bounds = array<i64: 1, 128>}, {transform_indices = @transform_4, window_bounds = array<i64: 1, 1>}, {transform_indices = @transform_5, window_bounds = array<i64: 1, 8>}]} {
    %c0 = arith.constant 0 : index
    %c0_0 = arith.constant 0 : index
    %0 = vector.load %arg1[%c0, %c0_0] : memref<8x32xf32, #tpu.memory_space<vmem>>, vector<8x32xf32>
    %1 = arith.truncf %0 : vector<8x32xf32> to vector<8x32xbf16>
    %c0_1 = arith.constant 0 : index
    %c0_2 = arith.constant 0 : index
    %2 = vector.load %arg2[%c0_1, %c0_2] : memref<32x128xbf16, #tpu.memory_space<vmem>>, vector<32x128xbf16>
    %cst = arith.constant dense<0.000000e+00> : vector<8x128xf32>
    %3 = tpu.matmul %1, %2, %cst {dimension_numbers = #tpu.dot_dimension_numbers<[1], [0], [0], [1], [0, 0, 1, 1], [], []>} : vector<8x32xbf16>, vector<32x128xbf16>, vector<8x128xf32> -> vector<8x128xf32>
    %c0_3 = arith.constant 0 : index
    %c0_4 = arith.constant 0 : index
    %4 = vector.load %arg3[%c0_3, %c0_4] : memref<1x128xf32, #tpu.memory_space<vmem>>, vector<1x128xf32>
    %5 = vector.broadcast %4 : vector<1x128xf32> to vector<8x128xf32>
    %6 = arith.addf %3, %5 : vector<8x128xf32>
    %cst_5 = arith.constant 0.000000e+00 : f32
    %7 = vector.broadcast %cst_5 : f32 to vector<8x128xf32>
    %8 = arith.maximumf %6, %7 : vector<8x128xf32>
    %c0_6 = arith.constant 0 : index
    %c0_7 = arith.constant 0 : index
    %9 = vector.load %arg4[%c0_6, %c0_7] : memref<1x128xf32, #tpu.memory_space<vmem>>, vector<1x128xf32>
    %10 = vector.broadcast %9 : vector<1x128xf32> to vector<8x128xf32>
    %11 = arith.mulf %8, %10 : vector<8x128xf32>
    %cst_8 = arith.constant dense<0.000000e+00> : vector<8xf32>
    %12 = vector.multi_reduction <add>, %11, %cst_8 [1] : vector<8x128xf32> to vector<8xf32>
    %13 = vector.shape_cast %12 : vector<8xf32> to vector<8x1xf32>
    %14 = tpu.transpose %13, [1, 0] : vector<8x1xf32> -> vector<1x8xf32>
    %c0_9 = arith.constant 0 : index
    %c0_10 = arith.constant 0 : index
    %15 = memref.load %arg5[%c0_9, %c0_10] : memref<1x1xf32, #tpu.memory_space<smem>>
    %16 = vector.broadcast %15 : f32 to vector<1x8xf32>
    %17 = arith.addf %14, %16 : vector<1x8xf32>
    %cst_11 = arith.constant 0.000000e+00 : f32
    %18 = vector.broadcast %cst_11 : f32 to vector<1x8xf32>
    %19 = arith.subf %18, %17 : vector<1x8xf32>
    %20 = math.exp %19 : vector<1x8xf32>
    %cst_12 = arith.constant 1.000000e+00 : f32
    %21 = vector.broadcast %cst_12 : f32 to vector<1x8xf32>
    %22 = arith.addf %21, %20 : vector<1x8xf32>
    %cst_13 = arith.constant 1.000000e+00 : f32
    %23 = vector.broadcast %cst_13 : f32 to vector<1x8xf32>
    %24 = arith.divf %23, %22 : vector<1x8xf32>
    %c0_14 = arith.constant 0 : index
    %c0_15 = arith.constant 0 : index
    %25 = vector.load %arg6[%c0_14, %c0_15] : memref<1x8xf32, #tpu.memory_space<vmem>>, vector<1x8xf32>
    tpu.vector_store %arg6[%c0_14, %c0_15], %24 {strides = array<i32>} : memref<1x8xf32, #tpu.memory_space<vmem>>, vector<1x8xf32>,
    return
  }
  func.func @transform_0(%arg0: i32) -> (i32, i32) {
    %c0_i32 = arith.constant 0 : i32
    %c0_i32_0 = arith.constant 0 : i32
    return %arg0, %c0_i32 : i32, i32
  }
  func.func @transform_1(%arg0: i32) -> (i32, i32) {
    %c0_i32 = arith.constant 0 : i32
    %c0_i32_0 = arith.constant 0 : i32
    %c0_i32_1 = arith.constant 0 : i32
    return %c0_i32, %c0_i32_0 : i32, i32
  }
  func.func @transform_2(%arg0: i32) -> (i32, i32) {
    %c0_i32 = arith.constant 0 : i32
    %c0_i32_0 = arith.constant 0 : i32
    %c0_i32_1 = arith.constant 0 : i32
    return %c0_i32, %c0_i32_0 : i32, i32
  }
  func.func @transform_3(%arg0: i32) -> (i32, i32) {
    %c0_i32 = arith.constant 0 : i32
    %c0_i32_0 = arith.constant 0 : i32
    %c0_i32_1 = arith.constant 0 : i32
    return %c0_i32, %c0_i32_0 : i32, i32
  }
  func.func @transform_4(%arg0: i32) -> (i32, i32) {
    %c0_i32 = arith.constant 0 : i32
    %c0_i32_0 = arith.constant 0 : i32
    %c0_i32_1 = arith.constant 0 : i32
    return %c0_i32, %c0_i32_0 : i32, i32
  }
  func.func @transform_5(%arg0: i32) -> (i32, i32) {
    %c0_i32 = arith.constant 0 : i32
    %c0_i32_0 = arith.constant 0 : i32
    return %c0_i32, %arg0 : i32, i32
  }
}

module attributes {stable_mosaic.version = 11 : i64} {
  func.func @_mlp_kernel_col(%arg0: i32, %arg1: memref<8x32xf32, #tpu.memory_space<vmem>>, %arg2: memref<32x128xbf16, #tpu.memory_space<vmem>>, %arg3: memref<1x128xf32, #tpu.memory_space<vmem>>, %arg4: memref<1x128xf32, #tpu.memory_space<vmem>>, %arg5: memref<1x1xf32, #tpu.memory_space<smem>>, %arg6: memref<8x1xf32, #tpu.memory_space<vmem>>) attributes {dimension_semantics = [#tpu.dimension_semantics<parallel>], iteration_bounds = array<i64: 1>, scalar_prefetch = 0 : i64, scratch_operands = 0 : i64, tpu.core_type = #tpu.core_type<tc>, window_params = [{transform_indices = @transform_0, window_bounds = array<i64: 8, 32>}, {pipeline_mode = #tpu.pipeline_mode<synchronous>, transform_indices = @transform_1, window_bounds = array<i64: 32, 128>}, {pipeline_mode = #tpu.pipeline_mode<synchronous>, transform_indices = @transform_2, window_bounds = array<i64: 1, 128>}, {pipeline_mode = #tpu.pipeline_mode<synchronous>, transform_indices = @transform_3, window_bounds = array<i64: 1, 128>}, {transform_indices = @transform_4, window_bounds = array<i64: 1, 1>}, {transform_indices = @transform_5, window_bounds = array<i64: 8, 1>}]} {
    %c0 = arith.constant 0 : index
    %c0_0 = arith.constant 0 : index
    %0 = vector.load %arg1[%c0, %c0_0] : memref<8x32xf32, #tpu.memory_space<vmem>>, vector<8x32xf32>
    %1 = arith.truncf %0 : vector<8x32xf32> to vector<8x32xbf16>
    %c0_1 = arith.constant 0 : index
    %c0_2 = arith.constant 0 : index
    %2 = vector.load %arg2[%c0_1, %c0_2] : memref<32x128xbf16, #tpu.memory_space<vmem>>, vector<32x128xbf16>
    %cst = arith.constant dense<0.000000e+00> : vector<8x128xf32>
    %3 = tpu.matmul %1, %2, %cst {dimension_numbers = #tpu.dot_dimension_numbers<[1], [0], [0], [1], [0, 0, 1, 1], [], []>} : vector<8x32xbf16>, vector<32x128xbf16>, vector<8x128xf32> -> vector<8x128xf32>
    %c0_3 = arith.constant 0 : index
    %c0_4 = arith.constant 0 : index
    %4 = vector.load %arg3[%c0_3, %c0_4] : memref<1x128xf32, #tpu.memory_space<vmem>>, vector<1x128xf32>
    %5 = vector.broadcast %4 : vector<1x128xf32> to vector<8x128xf32>
    %6 = arith.addf %3, %5 : vector<8x128xf32>
    %cst_5 = arith.constant 0.000000e+00 : f32
    %7 = vector.broadcast %cst_5 : f32 to vector<8x128xf32>
    %8 = arith.maximumf %6, %7 : vector<8x128xf32>
    %c0_6 = arith.constant 0 : index
    %c0_7 = arith.constant 0 : index
    %9 = vector.load %arg4[%c0_6, %c0_7] : memref<1x128xf32, #tpu.memory_space<vmem>>, vector<1x128xf32>
    %10 = vector.broadcast %9 : vector<1x128xf32> to vector<8x128xf32>
    %11 = arith.mulf %8, %10 : vector<8x128xf32>
    %cst_8 = arith.constant dense<0.000000e+00> : vector<8xf32>
    %12 = vector.multi_reduction <add>, %11, %cst_8 [1] : vector<8x128xf32> to vector<8xf32>
    %13 = vector.shape_cast %12 : vector<8xf32> to vector<8x1xf32>
    %c0_9 = arith.constant 0 : index
    %c0_10 = arith.constant 0 : index
    %14 = memref.load %arg5[%c0_9, %c0_10] : memref<1x1xf32, #tpu.memory_space<smem>>
    %15 = vector.broadcast %14 : f32 to vector<8x1xf32>
    %16 = arith.addf %13, %15 : vector<8x1xf32>
    %cst_11 = arith.constant 0.000000e+00 : f32
    %17 = vector.broadcast %cst_11 : f32 to vector<8x1xf32>
    %18 = arith.subf %17, %16 : vector<8x1xf32>
    %19 = math.exp %18 : vector<8x1xf32>
    %cst_12 = arith.constant 1.000000e+00 : f32
    %20 = vector.broadcast %cst_12 : f32 to vector<8x1xf32>
    %21 = arith.addf %20, %19 : vector<8x1xf32>
    %cst_13 = arith.constant 1.000000e+00 : f32
    %22 = vector.broadcast %cst_13 : f32 to vector<8x1xf32>
    %23 = arith.divf %22, %21 : vector<8x1xf32>
    %c0_14 = arith.constant 0 : index
    %c0_15 = arith.constant 0 : index
    %24 = vector.load %arg6[%c0_14, %c0_15] : memref<8x1xf32, #tpu.memory_space<vmem>>, vector<8x1xf32>
    tpu.vector_store %arg6[%c0_14, %c0_15], %23 {strides = array<i32>} : memref<8x1xf32, #tpu.memory_space<vmem>>, vector<8x1xf32>,
    return
  }
  func.func @transform_0(%arg0: i32) -> (i32, i32) {
    %c0_i32 = arith.constant 0 : i32
    %c0_i32_0 = arith.constant 0 : i32
    return %arg0, %c0_i32 : i32, i32
  }
  func.func @transform_1(%arg0: i32) -> (i32, i32) {
    %c0_i32 = arith.constant 0 : i32
    %c0_i32_0 = arith.constant 0 : i32
    %c0_i32_1 = arith.constant 0 : i32
    return %c0_i32, %c0_i32_0 : i32, i32
  }
  func.func @transform_2(%arg0: i32) -> (i32, i32) {
    %c0_i32 = arith.constant 0 : i32
    %c0_i32_0 = arith.constant 0 : i32
    %c0_i32_1 = arith.constant 0 : i32
    return %c0_i32, %c0_i32_0 : i32, i32
  }
  func.func @transform_3(%arg0: i32) -> (i32, i32) {
    %c0_i32 = arith.constant 0 : i32
    %c0_i32_0 = arith.constant 0 : i32
    %c0_i32_1 = arith.constant 0 : i32
    return %c0_i32, %c0_i32_0 : i32, i32
  }
  func.func @transform_4(%arg0: i32) -> (i32, i32) {
    %c0_i32 = arith.constant 0 : i32
    %c0_i32_0 = arith.constant 0 : i32
    %c0_i32_1 = arith.constant 0 : i32
    return %c0_i32, %c0_i32_0 : i32, i32
  }
  func.func @transform_5(%arg0: i32) -> (i32, i32) {
    %c0_i32 = arith.constant 0 : i32
    %c0_i32_0 = arith.constant 0 : i32
    return %arg0, %c0_i32 : i32, i32
  }
}

</mosaic_0001>

<llo_original>
// kernel: tpu_custom_call.1
$region0: #{tpu_custom_call.1}
  #allocation0 [shape = 'u32[]', space=smem, size = 0x4, offset = 0x4, fixed_abs, tag = 'smem constant byte address 0x4 - core index']
  #allocation1 [shape = 'u32[144,128]{1,0:T(1,128)}', space=vmem, size = 0x12000, scoped, tag = 'internal scratch']
  #allocation2 [shape = 'f32[1,1]{1,0:T(1,128)S(6)}', space=smem, size = 0x200, scoped, tag = 'scoped memory for tpu_custom_call.1']
  %s0 = inlined_call_operand.hbm [shape: f32[8,32], index: 0, kind: input, shape index: {}]
  %s1 = inlined_call_operand.hbm [shape: bf16[32,128], index: 1, kind: input, shape index: {}]
  %s2 = inlined_call_operand.vmem [shape: f32[1,128], index: 2, kind: input, shape index: {}]
  %s3 = inlined_call_operand.vmem [shape: f32[1,128], index: 3, kind: input, shape index: {}]
  %s4 = inlined_call_operand.<no memory space> [shape: f32[1,1], index: 4, kind: input, shape index: {}]
  %s5 = inlined_call_operand.hbm [shape: f32[1,8], index: 5, kind: output, shape index: {}]
  %s6 = sld [smem:[#allocation0]]
  $region38: #{tpu_custom_call.1} parent=0
    _
  %s8 = ssub.s32 1, %s6
  %s9 = scalar_select 0, %s8, %s6
  %10 = sst [smem:[#allocation2]] %s4
  $region1: #{tpu_custom_call.1} parent=0
    #allocation3 [shape = 'u8[4096]{0}', space=vmem, size = 0x1000, scoped, tag = 'input window, operand 0, single buffered']
    #allocation4 [shape = 's32[1]{0}', space=sflag, size = 0x4, scoped, tag = 'scoped memory for tpu_custom_call.1']
    #allocation5 [shape = 's32[1]{0}', space=sflag, size = 0x4, scoped, tag = 'scoped memory for tpu_custom_call.1']
    #allocation6 [shape = 'u8[8192]{0}', space=vmem, size = 0x2000, scoped, tag = 'input window, operand 1, single buffered']
    #allocation7 [shape = 's32[1]{0}', space=sflag, size = 0x4, scoped, tag = 'scoped memory for tpu_custom_call.1']
    #allocation8 [shape = 'u8[512]{0}', space=vmem, size = 0x400, scoped, tag = 'output window, operand 0, single buffered']
    %11 = vsyncpa [#allocation4], 0
    %12 = vsyncpa [#allocation7], 0
    %13 = vsyncpa [#allocation5], 0
    // Predicated region
    $region2: #{tpu_custom_call.1} parent=1 // pred_check
      _
    $region3: #{tpu_custom_call.1} parent=1 // pred_check_branch
      %15 = sbr.rel (0) target = $region5
    $region4: #{tpu_custom_call.1} parent=1 // pred_region
      %s17 = ssub.s32 128, 128
      %18 = vsyncadd [#allocation4], %s17
      %s20 = sshll.u32 [#allocation3], 4
      %s21 = int_to_ptr.vmem [resolvable:$true] %s20
      %23 = dma.hbm_to_vmem [thread:$0]  %s0, 128, %s21, [#allocation4]
    $region5: #{tpu_custom_call.1} parent=1 // pred_fallthru
      _
    // Predicated region
    $region6: #{tpu_custom_call.1} parent=1 // pred_check
      _
    $region7: #{tpu_custom_call.1} parent=1 // pred_check_branch
      %25 = sbr.rel (0) target = $region9
    $region8: #{tpu_custom_call.1} parent=1 // pred_region
      %s27 = ssub.s32 256, 256
      %28 = vsyncadd [#allocation7], %s27
      %s29 = sshll.u32 [#allocation6], 4
      %s30 = int_to_ptr.vmem [resolvable:$true] %s29
      %35 = dma.hbm_to_vmem [thread:$0]  %s1, 256, %s30, [#allocation7], 64, 64, 4
    $region9: #{tpu_custom_call.1} parent=1 // pred_fallthru
      _
    // Predicated region
    $region10: #{tpu_custom_call.1} parent=1 // pred_check
      _
    $region11: #{tpu_custom_call.1} parent=1 // pred_check_branch
      %37 = sbr.rel (0) target = $region13
    $region12: #{tpu_custom_call.1} parent=1 // pred_region
      _
    $region13: #{tpu_custom_call.1} parent=1 // pred_fallthru
      _
    // Predicated region
    $region14: #{tpu_custom_call.1} parent=1 // pred_check
      _
    $region15: #{tpu_custom_call.1} parent=1 // pred_check_branch
      %39 = sbr.rel (0) target = $region17
    $region16: #{tpu_custom_call.1} parent=1 // pred_region
      _
    $region17: #{tpu_custom_call.1} parent=1 // pred_fallthru
      _
    // Predicated region
    $region18: #{tpu_custom_call.1} parent=1 // pred_check
      _
    $region19: #{tpu_custom_call.1} parent=1 // pred_check_branch
      %41 = sbr.rel (0) target = $region21
    $region20: #{tpu_custom_call.1} parent=1 // pred_region
      _
    $region21: #{tpu_custom_call.1} parent=1 // pred_fallthru
      _
    // Predicated region
    $region22: #{tpu_custom_call.1} parent=1 // pred_check
      _
    $region23: #{tpu_custom_call.1} parent=1 // pred_check_branch
      %43 = sbr.rel (0) target = $region25
    $region24: #{tpu_custom_call.1} parent=1 // pred_region
      %44 = dma.done [#allocation4], 128
    $region25: #{tpu_custom_call.1} parent=1 // pred_fallthru
      _
    // Predicated region
    $region26: #{tpu_custom_call.1} parent=1 // pred_check
      _
    $region27: #{tpu_custom_call.1} parent=1 // pred_check_branch
      %46 = sbr.rel (0) target = $region29
    $region28: #{tpu_custom_call.1} parent=1 // pred_region
      %47 = dma.done [#allocation7], 256
    $region29: #{tpu_custom_call.1} parent=1 // pred_fallthru
      _
    %v49 = vld [vmem:[#allocation3] sm:$0xff]
    %v50 = vpack.c.bf16 %v49, %v49
    %v51 = vld [vmem:[#allocation6] sm:$0xf]
    %v52 = vld [vmem:[#allocation6 + $0x4] sm:$0xf]
    %v53 = vld [vmem:[#allocation6 + $0x8] sm:$0xf]
    %v54 = vld [vmem:[#allocation6 + $0xc] sm:$0xf]
    %v55 = vld [vmem:[%s2] sm:$0x1]
    %v57 = vlaneseq
    %v58 = vshrl.u32 %v57, 7
    %v59 = vsub.s32 0, %v58
    %v60 = vrot.slane %v55, %v59
    %v66 = vunpack.c.l.b16 %v51
    %v67 = vunpack.c.l.b16 %v52
    %v68 = vunpack.c.l.b16 %v53
    %v69 = vunpack.c.l.b16 %v54
    %v70 = vpack.c.b16 %v67, %v66
    %v71 = vpack.c.b16 %v69, %v68
    %vm74 = vcmask 261120
    %v76 = vsel %vm74, %v50, 0
    %78 = vmatprep.subr.bf16.mxu0 0
    %79 = vmatpush1.bf16.msra.mxu0 %v70
    %80 = vmatprep.subr.bf16.mxu0 0
    %81 = vmatpush1.bf16.msra.mxu0 %v71
    %82 = vmatprep.subr.bf16.mxu0 0
    %83 = vmatpush1.bf16.msra.mxu0 0
    %84 = vmatprep.subr.bf16.mxu0 0
    %85 = vmatpush1.bf16.msra.mxu0 0
    %86 = vmatprep.subr.bf16.mxu0 0
    %87 = vmatpush1.bf16.msra.mxu0 0
    %88 = vmatprep.subr.bf16.mxu0 0
    %89 = vmatpush1.bf16.msra.mxu0 0
    %90 = vmatprep.subr.bf16.mxu0 0
    %91 = vmatpush1.bf16.msra.mxu0 0
    %92 = vmatprep.subr.bf16.mxu0 0
    %93 = vmatpush1.bf16.msra.mxu0 0
    %94 = vmatprep.subr.bf16.mxu0 0
    %95 = vmatpush1.bf16.msra.mxu0 0
    %96 = vmatprep.subr.bf16.mxu0 0
    %97 = vmatpush1.bf16.msra.mxu0 0
    %98 = vmatprep.subr.bf16.mxu0 0
    %99 = vmatpush1.bf16.msra.mxu0 0
    %100 = vmatprep.subr.bf16.mxu0 0
    %101 = vmatpush1.bf16.msra.mxu0 0
    %102 = vmatprep.subr.bf16.mxu0 0
    %103 = vmatpush1.bf16.msra.mxu0 0
    %104 = vmatprep.subr.bf16.mxu0 0
    %105 = vmatpush1.bf16.msra.mxu0 0
    %106 = vmatprep.subr.bf16.mxu0 0
    %107 = vmatpush1.bf16.msra.mxu0 0
    %108 = vmatprep.subr.bf16.mxu0 0
    %109 = vmatpush1.bf16.msra.mxu0 0
    %110 = vmatprep.mubr.bf16.mxu0 0
    %111 = vmatmul.mubr.bf16.gmra.mrb[0].mxu0 %v76
    %v112 = vpop.f32.mrb[0].mxu0
    %v113 = vadd.f32 %v60, %v112
    %v114 = vpop.f32.mrb[0].mxu0
    %v115 = vpop.f32.mrb[0].mxu0
    %v116 = vpop.f32.mrb[0].mxu0
    %117 = vdwg.mxu0
    %v118 = vmax.f32 %v113, 0.0
    %v119 = vld [vmem:[%s3] sm:$0x1]
    %v121 = vlaneseq
    %v122 = vshrl.u32 %v121, 7
    %v123 = vsub.s32 0, %v122
    %v124 = vrot.slane %v119, %v123
    %v126 = vmul.f32 %v118, %v124
    %127 = vadd.xlane.f32.xlu0 %v126
    %v128 = vpop.xlane.xlu0 %127
    %129 = vxpose.xlu0.b32.start [1/16] %v128, 128
    %130 = vxpose.xlu0.b32.cont [2/16] 0.0, 128
    %131 = vxpose.xlu0.b32.cont [3/16] 0.0, 128
    %132 = vxpose.xlu0.b32.cont [4/16] 0.0, 128
    %133 = vxpose.xlu0.b32.cont [5/16] 0.0, 128
    %134 = vxpose.xlu0.b32.cont [6/16] 0.0, 128
    %135 = vxpose.xlu0.b32.cont [7/16] 0.0, 128
    %136 = vxpose.xlu0.b32.cont [8/16] 0.0, 128
    %137 = vxpose.xlu0.b32.cont [9/16] 0.0, 128
    %138 = vxpose.xlu0.b32.cont [10/16] 0.0, 128
    %139 = vxpose.xlu0.b32.cont [11/16] 0.0, 128
    %140 = vxpose.xlu0.b32.cont [12/16] 0.0, 128
    %141 = vxpose.xlu0.b32.cont [13/16] 0.0, 128
    %142 = vxpose.xlu0.b32.cont [14/16] 0.0, 128
    %143 = vxpose.xlu0.b32.cont [15/16] 0.0, 128
    %144 = vxpose.xlu0.b32.end [16/16] 0.0, 128
    %v145 = vpop.trf.xlu0
    %v146 = vpop.trf.xlu0
    %v147 = vpop.trf.xlu0
    %v148 = vpop.trf.xlu0
    %v149 = vpop.trf.xlu0
    %v150 = vpop.trf.xlu0
    %v151 = vpop.trf.xlu0
    %v152 = vpop.trf.xlu0
    %v153 = vpop.trf.xlu0
    %v154 = vpop.trf.xlu0
    %v155 = vpop.trf.xlu0
    %v156 = vpop.trf.xlu0
    %v157 = vpop.trf.xlu0
    %v158 = vpop.trf.xlu0
    %v159 = vpop.trf.xlu0
    %v160 = vpop.trf.xlu0
    %s161 = sld [smem:[#allocation2]]
    %v162 = vstv %s161
    %v163 = vadd.f32 %v145, %v162
    %v164 = vsub.f32 0.0, %v163
    %v165 = vmul.f32 %v164, 1.442695
    %v166 = vpow.pop %v165
    %v167 = vadd.f32 %v166, 1.0
    %v168 = vrcp.pop %v167
    %v169 = vmul.f32 1.0, %v168
    %vm170 = vcmask 57344
    %171 = vst.msk [vmem:[#allocation8] sm:$0x1] %vm170, %v169
    // Predicated region
    $region30: #{tpu_custom_call.1} parent=1 // pred_check
      _
    $region31: #{tpu_custom_call.1} parent=1 // pred_check_branch
      %173 = sbr.rel (0) target = $region33
    $region32: #{tpu_custom_call.1} parent=1 // pred_region
      %s175 = ssub.s32 16, 16
      %176 = vsyncadd [#allocation5], %s175
      %s178 = sshll.u32 [#allocation8], 4
      %s179 = int_to_ptr.vmem [resolvable:$true] %s178
      %181 = dma.vmem_to_hbm [thread:$0]  %s179, 16, %s5, [#allocation5]
    $region33: #{tpu_custom_call.1} parent=1 // pred_fallthru
      _
    // Predicated region
    $region34: #{tpu_custom_call.1} parent=1 // pred_check
      _
    $region35: #{tpu_custom_call.1} parent=1 // pred_check_branch
      %183 = sbr.rel (0) target = $region37
    $region36: #{tpu_custom_call.1} parent=1 // pred_region
      %184 = dma.done [#allocation5], 16
    $region37: #{tpu_custom_call.1} parent=1 // pred_fallthru
      _
    %185 = vsyncpa [#allocation4], 1
    %186 = vsyncpa [#allocation7], 1
    %187 = vsyncpa [#allocation5], 1

// kernel: tpu_custom_call.1
$region0: #{tpu_custom_call.1}
  #allocation0 [shape = 'u32[]', space=smem, size = 0x4, offset = 0x4, fixed_abs, tag = 'smem constant byte address 0x4 - core index']
  #allocation1 [shape = 'u32[144,128]{1,0:T(1,128)}', space=vmem, size = 0x12000, scoped, tag = 'internal scratch']
  #allocation2 [shape = 'f32[1,1]{1,0:T(1,128)S(6)}', space=smem, size = 0x200, scoped, tag = 'scoped memory for tpu_custom_call.1']
  %s0 = inlined_call_operand.hbm [shape: f32[8,32], index: 0, kind: input, shape index: {}]
  %s1 = inlined_call_operand.hbm [shape: bf16[32,128], index: 1, kind: input, shape index: {}]
  %s2 = inlined_call_operand.vmem [shape: f32[1,128], index: 2, kind: input, shape index: {}]
  %s3 = inlined_call_operand.vmem [shape: f32[1,128], index: 3, kind: input, shape index: {}]
  %s4 = inlined_call_operand.<no memory space> [shape: f32[1,1], index: 4, kind: input, shape index: {}]
  %s5 = inlined_call_operand.vmem [shape: f32[8,1], index: 5, kind: output, shape index: {}]
  %s6 = sld [smem:[#allocation0]]
  $region38: #{tpu_custom_call.1} parent=0
    _
  %s8 = ssub.s32 1, %s6
  %s9 = scalar_select 0, %s8, %s6
  %10 = sst [smem:[#allocation2]] %s4
  $region1: #{tpu_custom_call.1} parent=0
    #allocation3 [shape = 'u8[4096]{0}', space=vmem, size = 0x1000, scoped, tag = 'input window, operand 0, single buffered']
    #allocation4 [shape = 's32[1]{0}', space=sflag, size = 0x4, scoped, tag = 'scoped memory for tpu_custom_call.1']
    #allocation5 [shape = 'u8[8192]{0}', space=vmem, size = 0x2000, scoped, tag = 'input window, operand 1, single buffered']
    #allocation6 [shape = 's32[1]{0}', space=sflag, size = 0x4, scoped, tag = 'scoped memory for tpu_custom_call.1']
    %11 = vsyncpa [#allocation4], 0
    %12 = vsyncpa [#allocation6], 0
    // Predicated region
    $region2: #{tpu_custom_call.1} parent=1 // pred_check
      _
    $region3: #{tpu_custom_call.1} parent=1 // pred_check_branch
      %14 = sbr.rel (0) target = $region5
    $region4: #{tpu_custom_call.1} parent=1 // pred_region
      %s16 = ssub.s32 128, 128
      %17 = vsyncadd [#allocation4], %s16
      %s19 = sshll.u32 [#allocation3], 4
      %s20 = int_to_ptr.vmem [resolvable:$true] %s19
      %22 = dma.hbm_to_vmem [thread:$0]  %s0, 128, %s20, [#allocation4]
    $region5: #{tpu_custom_call.1} parent=1 // pred_fallthru
      _
    // Predicated region
    $region6: #{tpu_custom_call.1} parent=1 // pred_check
      _
    $region7: #{tpu_custom_call.1} parent=1 // pred_check_branch
      %24 = sbr.rel (0) target = $region9
    $region8: #{tpu_custom_call.1} parent=1 // pred_region
      %s26 = ssub.s32 256, 256
      %27 = vsyncadd [#allocation6], %s26
      %s28 = sshll.u32 [#allocation5], 4
      %s29 = int_to_ptr.vmem [resolvable:$true] %s28
      %34 = dma.hbm_to_vmem [thread:$0]  %s1, 256, %s29, [#allocation6], 64, 64, 4
    $region9: #{tpu_custom_call.1} parent=1 // pred_fallthru
      _
    // Predicated region
    $region10: #{tpu_custom_call.1} parent=1 // pred_check
      _
    $region11: #{tpu_custom_call.1} parent=1 // pred_check_branch
      %36 = sbr.rel (0) target = $region13
    $region12: #{tpu_custom_call.1} parent=1 // pred_region
      _
    $region13: #{tpu_custom_call.1} parent=1 // pred_fallthru
      _
    // Predicated region
    $region14: #{tpu_custom_call.1} parent=1 // pred_check
      _
    $region15: #{tpu_custom_call.1} parent=1 // pred_check_branch
      %38 = sbr.rel (0) target = $region17
    $region16: #{tpu_custom_call.1} parent=1 // pred_region
      _
    $region17: #{tpu_custom_call.1} parent=1 // pred_fallthru
      _
    // Predicated region
    $region18: #{tpu_custom_call.1} parent=1 // pred_check
      _
    $region19: #{tpu_custom_call.1} parent=1 // pred_check_branch
      %40 = sbr.rel (0) target = $region21
    $region20: #{tpu_custom_call.1} parent=1 // pred_region
      _
    $region21: #{tpu_custom_call.1} parent=1 // pred_fallthru
      _
    // Predicated region
    $region22: #{tpu_custom_call.1} parent=1 // pred_check
      _
    $region23: #{tpu_custom_call.1} parent=1 // pred_check_branch
      %42 = sbr.rel (0) target = $region25
    $region24: #{tpu_custom_call.1} parent=1 // pred_region
      %43 = dma.done [#allocation4], 128
    $region25: #{tpu_custom_call.1} parent=1 // pred_fallthru
      _
    // Predicated region
    $region26: #{tpu_custom_call.1} parent=1 // pred_check
      _
    $region27: #{tpu_custom_call.1} parent=1 // pred_check_branch
      %45 = sbr.rel (0) target = $region29
    $region28: #{tpu_custom_call.1} parent=1 // pred_region
      %46 = dma.done [#allocation6], 256
    $region29: #{tpu_custom_call.1} parent=1 // pred_fallthru
      _
    %v48 = vld [vmem:[#allocation3] sm:$0xff]
    %v49 = vpack.c.bf16 %v48, %v48
    %v50 = vld [vmem:[#allocation5] sm:$0xf]
    %v51 = vld [vmem:[#allocation5 + $0x4] sm:$0xf]
    %v52 = vld [vmem:[#allocation5 + $0x8] sm:$0xf]
    %v53 = vld [vmem:[#allocation5 + $0xc] sm:$0xf]
    %v54 = vld [vmem:[%s2] sm:$0x1]
    %v56 = vlaneseq
    %v57 = vshrl.u32 %v56, 7
    %v58 = vsub.s32 0, %v57
    %v59 = vrot.slane %v54, %v58
    %v65 = vunpack.c.l.b16 %v50
    %v66 = vunpack.c.l.b16 %v51
    %v67 = vunpack.c.l.b16 %v52
    %v68 = vunpack.c.l.b16 %v53
    %v69 = vpack.c.b16 %v66, %v65
    %v70 = vpack.c.b16 %v68, %v67
    %vm73 = vcmask 261120
    %v75 = vsel %vm73, %v49, 0
    %77 = vmatprep.subr.bf16.mxu0 0
    %78 = vmatpush1.bf16.msra.mxu0 %v69
    %79 = vmatprep.subr.bf16.mxu0 0
    %80 = vmatpush1.bf16.msra.mxu0 %v70
    %81 = vmatprep.subr.bf16.mxu0 0
    %82 = vmatpush1.bf16.msra.mxu0 0
    %83 = vmatprep.subr.bf16.mxu0 0
    %84 = vmatpush1.bf16.msra.mxu0 0
    %85 = vmatprep.subr.bf16.mxu0 0
    %86 = vmatpush1.bf16.msra.mxu0 0
    %87 = vmatprep.subr.bf16.mxu0 0
    %88 = vmatpush1.bf16.msra.mxu0 0
    %89 = vmatprep.subr.bf16.mxu0 0
    %90 = vmatpush1.bf16.msra.mxu0 0
    %91 = vmatprep.subr.bf16.mxu0 0
    %92 = vmatpush1.bf16.msra.mxu0 0
    %93 = vmatprep.subr.bf16.mxu0 0
    %94 = vmatpush1.bf16.msra.mxu0 0
    %95 = vmatprep.subr.bf16.mxu0 0
    %96 = vmatpush1.bf16.msra.mxu0 0
    %97 = vmatprep.subr.bf16.mxu0 0
    %98 = vmatpush1.bf16.msra.mxu0 0
    %99 = vmatprep.subr.bf16.mxu0 0
    %100 = vmatpush1.bf16.msra.mxu0 0
    %101 = vmatprep.subr.bf16.mxu0 0
    %102 = vmatpush1.bf16.msra.mxu0 0
    %103 = vmatprep.subr.bf16.mxu0 0
    %104 = vmatpush1.bf16.msra.mxu0 0
    %105 = vmatprep.subr.bf16.mxu0 0
    %106 = vmatpush1.bf16.msra.mxu0 0
    %107 = vmatprep.subr.bf16.mxu0 0
    %108 = vmatpush1.bf16.msra.mxu0 0
    %109 = vmatprep.mubr.bf16.mxu0 0
    %110 = vmatmul.mubr.bf16.gmra.mrb[0].mxu0 %v75
    %v111 = vpop.f32.mrb[0].mxu0
    %v112 = vadd.f32 %v59, %v111
    %v113 = vpop.f32.mrb[0].mxu0
    %v114 = vpop.f32.mrb[0].mxu0
    %v115 = vpop.f32.mrb[0].mxu0
    %116 = vdwg.mxu0
    %v117 = vmax.f32 %v112, 0.0
    %v118 = vld [vmem:[%s3] sm:$0x1]
    %v120 = vlaneseq
    %v121 = vshrl.u32 %v120, 7
    %v122 = vsub.s32 0, %v121
    %v123 = vrot.slane %v118, %v122
    %v125 = vmul.f32 %v117, %v123
    %126 = vadd.xlane.f32.xlu0 %v125
    %v127 = vpop.xlane.xlu0 %126
    %s128 = sld [smem:[#allocation2]]
    %v129 = vstv %s128
    %v130 = vadd.f32 %v127, %v129
    %v131 = vsub.f32 0.0, %v130
    %v132 = vmul.f32 %v131, 1.442695
    %v133 = vpow.pop %v132
    %v134 = vadd.f32 %v133, 1.0
    %v135 = vrcp.pop %v134
    %v136 = vmul.f32 1.0, %v135
    %vm137 = vcmask 7168
    %138 = vst.msk [vmem:[%s5] sm:$0xff] %vm137, %v136
    // Predicated region
    $region30: #{tpu_custom_call.1} parent=1 // pred_check
      _
    $region31: #{tpu_custom_call.1} parent=1 // pred_check_branch
      %140 = sbr.rel (0) target = $region33
    $region32: #{tpu_custom_call.1} parent=1 // pred_region
      _
    $region33: #{tpu_custom_call.1} parent=1 // pred_fallthru
      _
    // Predicated region
    $region34: #{tpu_custom_call.1} parent=1 // pred_check
      _
    $region35: #{tpu_custom_call.1} parent=1 // pred_check_branch
      %142 = sbr.rel (0) target = $region37
    $region36: #{tpu_custom_call.1} parent=1 // pred_region
      _
    $region37: #{tpu_custom_call.1} parent=1 // pred_fallthru
      _
    %143 = vsyncpa [#allocation4], 1
    %144 = vsyncpa [#allocation6], 1

</llo_original>
